<compile_context>
chip_gen: v5e
topology: v5e:2x2
jax: 0.10.0
libtpu: 0.0.40
codegen_flags: <defaults>
</compile_context>

<pallas_src>
import jax
import jax.numpy as jnp
from jax.experimental import pallas as pl
from jax.experimental.pallas import tpu as pltpu


def _round_up(v, m):
    return ((v + m - 1) // m) * m


def _sublane_multiple(itemsize):
    # Sub-32-bit dtypes pack along sublanes.
    return {4: 8, 2: 16, 1: 32}.get(int(itemsize), 8)


def _device_config():
    """Per-generation VMEM/tile budgets (conservative fallback if detection fails)."""
    kind = ""
    try:
        kind = jax.devices()[0].device_kind.lower()
    except Exception:
        pass
    if "v7" in kind:
        # 64 MiB physical VMEM / TC, 2 TCs: keep double-buffered inputs modest and
        # guarantee >= 2 grid tiles so both TensorCores issue DMAs.
        return dict(input_budget=20 << 20, interm_budget=4 << 20,
                    max_tb=1024, min_tiles=2, vmem_limit=48 << 20)
    if "v6" in kind:
        # 128 MiB physical VMEM: larger tiles amortize per-grid-step overhead.
        return dict(input_budget=24 << 20, interm_budget=6 << 20,
                    max_tb=2048, min_tiles=1, vmem_limit=64 << 20)
    # v5e (16 MiB scoped default) and unknown devices: stay conservative.
    return dict(input_budget=8 << 20, interm_budget=4 << 20,
                max_tb=512, min_tiles=1, vmem_limit=None)


def _choose_batch_tile(b, n, f, itemsize, cfg):
    sub = _sublane_multiple(itemsize)
    # (8,128)-padded per-row footprints of the input tiles (x + pos + neg + w),
    # double-buffered by the BlockSpec pipeline.
    n_pad = _round_up(max(n, 1), 8)          # sublane-padded 2nd-minor dim of neg
    f_pad = _round_up(max(f, 1), 128)        # lane-padded minor dim
    n_lanes = _round_up(max(n, 1), 128)      # lane-padded minor dim of the weights
    per_row_in = 2 * itemsize * (2 * f_pad + n_pad * f_pad + n_lanes)
    # f32 (tb, n, f) broadcast intermediate in the kernel body — cap it separately
    # so it stays a few MiB and does not spill.
    per_row_tmp = 4 * n_pad * f_pad

    tb = min(cfg["input_budget"] // max(per_row_in, 1),
             cfg["interm_budget"] // max(per_row_tmp, 1),
             cfg["max_tb"])
    tb = max(sub, (int(tb) // sub) * sub)

    padded_b = _round_up(b, sub)
    if cfg["min_tiles"] > 1 and padded_b >= cfg["min_tiles"] * sub:
        cap = (padded_b // cfg["min_tiles"] // sub) * sub
        tb = min(tb, max(cap, sub))          # keep every TensorCore busy (v7x)
    tb = min(tb, padded_b)
    return tb, sub


def _triplet_loss_kernel(x_ref, pos_ref, neg_ref, w_ref, out_ref):
    """One batch tile: sum(relu(pos_dis - neg_dis + w)) -> dense (1, 8, 128) tile."""
    x = x_ref[...].astype(jnp.float32)        # (tb, f)
    pos = pos_ref[...].astype(jnp.float32)    # (tb, f)
    neg = neg_ref[...].astype(jnp.float32)    # (tb, n, f)
    w = w_ref[...].astype(jnp.float32)        # (tb, n)

    d_pos = x - pos
    pos_dis = jnp.sum(d_pos * d_pos, axis=1, keepdims=True)      # (tb, 1)

    # Native-layout negatives: sublane-broadcast x across n, lane-reduce over f.
    d_neg = x[:, None, :] - neg                                  # (tb, n, f)
    neg_dis = jnp.sum(d_neg * d_neg, axis=2)                     # (tb, n)

    basic = pos_dis - neg_dis + w                                # (tb, n)
    partial = jnp.sum(jnp.maximum(basic, 0.0))

    # Lane/sublane-dense (1, 8, 128) partial-sum tile: one full vreg, unmasked store.
    out_ref[...] = jnp.full(out_ref.shape, partial, dtype=jnp.float32)


def _triplet_loss_ref(x, pos, neg, neg_weight):
    xe = x.astype(jnp.float32)[:, None, :]
    pe = pos.astype(jnp.float32)[:, None, :]
    ne = neg.astype(jnp.float32)
    w = neg_weight.astype(jnp.float32)
    pos_dis = jnp.sum(jnp.square(xe - pe), axis=2)               # (b, 1)
    neg_dis = jnp.sum(jnp.square(xe - ne), axis=2)               # (b, n)
    basic = pos_dis - neg_dis + w
    return jnp.mean(jnp.maximum(basic, jnp.zeros_like(basic)))


def triplet_loss(x, pos, neg, neg_weight, *, block_b=None, force_pallas=False):
    """Pallas TripletLoss. x:(b,f) pos:(b,f) neg:(b,n,f) neg_weight:(b,n) -> scalar f32."""
    if neg_weight is None:
        raise RuntimeError(
            "The neg_weight could not be None when using Triplet Loss.")
    b, f = x.shape
    n = neg.shape[1]

    cfg = _device_config()
    tb, sub = _choose_batch_tile(b, n, f, x.dtype.itemsize, cfg)
    if block_b is not None:
        tb = max(sub, _round_up(int(block_b), sub))
        tb = min(tb, _round_up(b, sub))

    padded_b = _round_up(b, tb)
    num_tiles = padded_b // tb

    # Single-grid-step problems get no pipelining; XLA's fused elementwise/reduce is
    # as fast or faster, so fall back unless the caller forces the Pallas path.
    if num_tiles < 2 and not force_pallas:
        return _triplet_loss_ref(x, pos, neg, neg_weight)

    if padded_b != b:
        pad = padded_b - b
        # Zero rows contribute relu(0 - 0 + 0) = 0 to the sum -> exact after padding.
        x = jnp.pad(x, ((0, pad), (0, 0)))
        pos = jnp.pad(pos, ((0, pad), (0, 0)))
        neg = jnp.pad(neg, ((0, pad), (0, 0), (0, 0)))
        neg_weight = jnp.pad(neg_weight, ((0, pad), (0, 0)))

    cp_kwargs = dict(dimension_semantics=("parallel",))  # megacore-splittable (v7x)
    if cfg["vmem_limit"] is not None:
        cp_kwargs["vmem_limit_bytes"] = cfg["vmem_limit"]

    partials = pl.pallas_call(
        _triplet_loss_kernel,
        out_shape=jax.ShapeDtypeStruct((num_tiles, 8, 128), jnp.float32),
        grid=(num_tiles,),
        in_specs=[
            pl.BlockSpec((tb, f), lambda i: (i, 0)),
            pl.BlockSpec((tb, f), lambda i: (i, 0)),
            pl.BlockSpec((tb, n, f), lambda i: (i, 0, 0)),
            pl.BlockSpec((tb, n), lambda i: (i, 0)),
        ],
        out_specs=pl.BlockSpec((1, 8, 128), lambda i: (i, 0, 0)),
        compiler_params=pltpu.CompilerParams(**cp_kwargs),
    )(x, pos, neg, neg_weight)

    # Final mean over the TRUE b*n (padding contributed exactly 0 to the sum).
    total = jnp.sum(partials[:, 0, 0])
    return total / jnp.float32(b * n)


if __name__ == "__main__":
    key = jax.random.PRNGKey(0)

    # 1) Aligned f32 shape, single tile, Pallas path forced.
    # 2) Ragged f32 shape with explicit small tile -> multi-tile grid + batch padding.
    # 3) bf16 inputs -> dtype-aware sublane alignment (16) + padding.
    cases = [
        dict(b=8, n=8, f=128, dtype=jnp.float32, block_b=None, tol=1e-5),
        dict(b=20, n=4, f=96, dtype=jnp.float32, block_b=8, tol=1e-5),
        dict(b=24, n=4, f=64, dtype=jnp.bfloat16, block_b=16, tol=2e-2),
    ]
    for c in cases:
        kx, kp, kn, kw, key = jax.random.split(key, 5)
        x = jax.random.normal(kx, (c["b"], c["f"]), dtype=jnp.float32).astype(c["dtype"])
        pos = jax.random.normal(kp, (c["b"], c["f"]), dtype=jnp.float32).astype(c["dtype"])
        neg = jax.random.normal(kn, (c["b"], c["n"], c["f"]), dtype=jnp.float32).astype(c["dtype"])
        neg_weight = jax.random.uniform(kw, (c["b"], c["n"]), dtype=jnp.float32).astype(c["dtype"])

        loss = triplet_loss(x, pos, neg, neg_weight,
                            block_b=c["block_b"], force_pallas=True)
        jax.block_until_ready(loss)

        ref = _triplet_loss_ref(x, pos, neg, neg_weight)
        assert jnp.allclose(loss, ref, rtol=c["tol"], atol=c["tol"]), (c, loss, ref)

        # Auto path (may short-circuit to the fused XLA reference for tiny inputs).
        loss_auto = triplet_loss(x, pos, neg, neg_weight)
        jax.block_until_ready(loss_auto)
        assert jnp.allclose(loss_auto, ref, rtol=c["tol"], atol=c["tol"]), (c, loss_auto, ref)

    print("KERNEL_OK")
</pallas_src>

<mosaic_0001>
module attributes {stable_mosaic.version = 11 : i64} {
  func.func @_triplet_loss_kernel(%arg0: i32, %arg1: memref<8x128xf32, #tpu.memory_space<vmem>>, %arg2: memref<8x128xf32, #tpu.memory_space<vmem>>, %arg3: memref<8x8x128xf32, #tpu.memory_space<vmem>>, %arg4: memref<8x8xf32, #tpu.memory_space<vmem>>, %arg5: memref<1x8x128xf32, #tpu.memory_space<vmem>>) attributes {dimension_semantics = [#tpu.dimension_semantics<parallel>], iteration_bounds = array<i64: 1>, scalar_prefetch = 0 : i64, scratch_operands = 0 : i64, tpu.core_type = #tpu.core_type<tc>, window_params = [{transform_indices = @transform_0, window_bounds = array<i64: 8, 128>}, {transform_indices = @transform_1, window_bounds = array<i64: 8, 128>}, {transform_indices = @transform_2, window_bounds = array<i64: 8, 8, 128>}, {transform_indices = @transform_3, window_bounds = array<i64: 8, 8>}, {transform_indices = @transform_4, window_bounds = array<i64: 1, 8, 128>}]} {
    %c0 = arith.constant 0 : index
    %c0_0 = arith.constant 0 : index
    %0 = vector.load %arg1[%c0, %c0_0] : memref<8x128xf32, #tpu.memory_space<vmem>>, vector<8x128xf32>
    %c0_1 = arith.constant 0 : index
    %c0_2 = arith.constant 0 : index
    %1 = vector.load %arg2[%c0_1, %c0_2] : memref<8x128xf32, #tpu.memory_space<vmem>>, vector<8x128xf32>
    %c0_3 = arith.constant 0 : index
    %c0_4 = arith.constant 0 : index
    %c0_5 = arith.constant 0 : index
    %2 = vector.load %arg3[%c0_3, %c0_4, %c0_5] : memref<8x8x128xf32, #tpu.memory_space<vmem>>, vector<8x8x128xf32>
    %c0_6 = arith.constant 0 : index
    %c0_7 = arith.constant 0 : index
    %3 = vector.load %arg4[%c0_6, %c0_7] : memref<8x8xf32, #tpu.memory_space<vmem>>, vector<8x8xf32>
    %4 = arith.subf %0, %1 : vector<8x128xf32>
    %5 = arith.mulf %4, %4 : vector<8x128xf32>
    %cst = arith.constant dense<0.000000e+00> : vector<8xf32>
    %6 = vector.multi_reduction <add>, %5, %cst [1] : vector<8x128xf32> to vector<8xf32>
    %7 = vector.shape_cast %6 : vector<8xf32> to vector<8x1xf32>
    %8 = vector.shape_cast %0 : vector<8x128xf32> to vector<8x1x128xf32>
    %9 = vector.broadcast %8 : vector<8x1x128xf32> to vector<8x8x128xf32>
    %10 = arith.subf %9, %2 : vector<8x8x128xf32>
    %11 = arith.mulf %10, %10 : vector<8x8x128xf32>
    %cst_8 = arith.constant dense<0.000000e+00> : vector<8x8xf32>
    %12 = vector.multi_reduction <add>, %11, %cst_8 [2] : vector<8x8x128xf32> to vector<8x8xf32>
    %13 = vector.broadcast %7 : vector<8x1xf32> to vector<8x8xf32>
    %14 = arith.subf %13, %12 : vector<8x8xf32>
    %15 = arith.addf %14, %3 : vector<8x8xf32>
    %cst_9 = arith.constant 0.000000e+00 : f32
    %16 = vector.broadcast %cst_9 : f32 to vector<8x8xf32>
    %17 = arith.maximumf %15, %16 : vector<8x8xf32>
    %18 = vector.shape_cast %17 : vector<8x8xf32> to vector<1x8x8xf32>
    %cst_10 = arith.constant dense<0.000000e+00> : vector<1xf32>
    %19 = vector.multi_reduction <add>, %18, %cst_10 [1, 2] : vector<1x8x8xf32> to vector<1xf32>
    %20 = vector.shape_cast %19 : vector<1xf32> to vector<1x1x1xf32>
    %21 = vector.extract %20[0, 0, 0] : f32 from vector<1x1x1xf32>
    %22 = vector.broadcast %21 : f32 to vector<1x8x128xf32>
    %c0_11 = arith.constant 0 : index
    %c0_12 = arith.constant 0 : index
    %c0_13 = arith.constant 0 : index
    %23 = vector.load %arg5[%c0_11, %c0_12, %c0_13] : memref<1x8x128xf32, #tpu.memory_space<vmem>>, vector<1x8x128xf32>
    tpu.vector_store %arg5[%c0_11, %c0_12, %c0_13], %22 {strides = array<i32>} : memref<1x8x128xf32, #tpu.memory_space<vmem>>, vector<1x8x128xf32>,
    return
  }
  func.func @transform_0(%arg0: i32) -> (i32, i32) {
    %c0_i32 = arith.constant 0 : i32
    %c0_i32_0 = arith.constant 0 : i32
    return %arg0, %c0_i32 : i32, i32
  }
  func.func @transform_1(%arg0: i32) -> (i32, i32) {
    %c0_i32 = arith.constant 0 : i32
    %c0_i32_0 = arith.constant 0 : i32
    return %arg0, %c0_i32 : i32, i32
  }
  func.func @transform_2(%arg0: i32) -> (i32, i32, i32) {
    %c0_i32 = arith.constant 0 : i32
    %c0_i32_0 = arith.constant 0 : i32
    %c0_i32_1 = arith.constant 0 : i32
    return %arg0, %c0_i32, %c0_i32_0 : i32, i32, i32
  }
  func.func @transform_3(%arg0: i32) -> (i32, i32) {
    %c0_i32 = arith.constant 0 : i32
    %c0_i32_0 = arith.constant 0 : i32
    return %arg0, %c0_i32 : i32, i32
  }
  func.func @transform_4(%arg0: i32) -> (i32, i32, i32) {
    %c0_i32 = arith.constant 0 : i32
    %c0_i32_0 = arith.constant 0 : i32
    %c0_i32_1 = arith.constant 0 : i32
    return %arg0, %c0_i32, %c0_i32_0 : i32, i32, i32
  }
}

</mosaic_0001>

<llo_original>
// kernel: tpu_custom_call.1
$region0: #{tpu_custom_call.1}
  #allocation0 [shape = 'u32[]', space=smem, size = 0x4, offset = 0x4, fixed_abs, tag = 'smem constant byte address 0x4 - core index']
  #allocation1 [shape = 'u32[72,128]{1,0:T(1,128)}', space=vmem, size = 0x9000, scoped, tag = 'internal scratch']
  %s0 = inlined_call_operand.hbm [shape: f32[8,128], index: 0, kind: input, shape index: {}]
  %s1 = inlined_call_operand.hbm [shape: f32[8,128], index: 1, kind: input, shape index: {}]
  %s2 = inlined_call_operand.hbm [shape: f32[8,8,128], index: 2, kind: input, shape index: {}]
  %s3 = inlined_call_operand.hbm [shape: f32[8,8], index: 3, kind: input, shape index: {}]
  %s4 = inlined_call_operand.hbm [shape: f32[1,8,128], index: 4, kind: output, shape index: {}]
  %s5 = sld [smem:[#allocation0]]
  $region42: #{tpu_custom_call.1} parent=0
    _
  %s7 = ssub.s32 1, %s5
  %s8 = scalar_select 0, %s7, %s5
  $region1: #{tpu_custom_call.1} parent=0
    #allocation2 [shape = 'u8[4096]{0}', space=vmem, size = 0x1000, scoped, tag = 'input window, operand 0, single buffered']
    #allocation3 [shape = 's32[1]{0}', space=sflag, size = 0x4, scoped, tag = 'scoped memory for tpu_custom_call.1']
    #allocation4 [shape = 's32[1]{0}', space=sflag, size = 0x4, scoped, tag = 'scoped memory for tpu_custom_call.1']
    #allocation5 [shape = 'u8[4096]{0}', space=vmem, size = 0x1000, scoped, tag = 'input window, operand 1, single buffered']
    #allocation6 [shape = 's32[1]{0}', space=sflag, size = 0x4, scoped, tag = 'scoped memory for tpu_custom_call.1']
    #allocation7 [shape = 'u8[32768]{0}', space=vmem, size = 0x8000, scoped, tag = 'input window, operand 2, single buffered']
    #allocation8 [shape = 'u8[4096]{0}', space=vmem, size = 0x1000, scoped, tag = 'input window, operand 3, single buffered']
    #allocation9 [shape = 's32[1]{0}', space=sflag, size = 0x4, scoped, tag = 'scoped memory for tpu_custom_call.1']
    #allocation10 [shape = 'u8[4096]{0}', space=vmem, size = 0x1000, scoped, tag = 'output window, operand 0, single buffered']
    %9 = vsyncpa [#allocation3], 0
    %10 = vsyncpa [#allocation6], 0
    %11 = vsyncpa [#allocation9], 0
    %12 = vsyncpa [#allocation4], 0
    // Predicated region
    $region2: #{tpu_custom_call.1} parent=1 // pred_check
      _
    $region3: #{tpu_custom_call.1} parent=1 // pred_check_branch
      %14 = sbr.rel (0) target = $region5
    $region4: #{tpu_custom_call.1} parent=1 // pred_region
      %16 = vsyncadd [#allocation3], 0
      %s18 = sshll.u32 %s0, 4
      %s19 = int_to_ptr.hbm [resolvable:$true] %s18
      %s20 = sshll.u32 [#allocation2], 4
      %s21 = int_to_ptr.vmem [resolvable:$true] %s20
      %23 = dma.hbm_to_vmem [thread:$0]  %s19, 128, %s21, [#allocation3]
    $region5: #{tpu_custom_call.1} parent=1 // pred_fallthru
      _
    // Predicated region
    $region6: #{tpu_custom_call.1} parent=1 // pred_check
      _
    $region7: #{tpu_custom_call.1} parent=1 // pred_check_branch
      %25 = sbr.rel (0) target = $region9
    $region8: #{tpu_custom_call.1} parent=1 // pred_region
      %27 = vsyncadd [#allocation6], 0
      %s29 = sshll.u32 %s1, 4
      %s30 = int_to_ptr.hbm [resolvable:$true] %s29
      %s31 = sshll.u32 [#allocation5], 4
      %s32 = int_to_ptr.vmem [resolvable:$true] %s31
      %34 = dma.hbm_to_vmem [thread:$0]  %s30, 128, %s32, [#allocation6]
    $region9: #{tpu_custom_call.1} parent=1 // pred_fallthru
      _
    // Predicated region
    $region10: #{tpu_custom_call.1} parent=1 // pred_check
      _
    $region11: #{tpu_custom_call.1} parent=1 // pred_check_branch
      %36 = sbr.rel (0) target = $region13
    $region12: #{tpu_custom_call.1} parent=1 // pred_region
      %38 = vsyncadd [#allocation6], 0
      %s39 = sshll.u32 %s2, 4
      %s40 = int_to_ptr.hbm [resolvable:$true] %s39
      %s41 = sshll.u32 [#allocation7], 4
      %s42 = int_to_ptr.vmem [resolvable:$true] %s41
      %47 = dma.hbm_to_vmem [thread:$0]  %s40, 1024, %s42, [#allocation6], 128, 128, 8
    $region13: #{tpu_custom_call.1} parent=1 // pred_fallthru
      _
    // Predicated region
    $region14: #{tpu_custom_call.1} parent=1 // pred_check
      _
    $region15: #{tpu_custom_call.1} parent=1 // pred_check_branch
      %49 = sbr.rel (0) target = $region17
    $region16: #{tpu_custom_call.1} parent=1 // pred_region
      %51 = vsyncadd [#allocation9], 0
      %s53 = sshll.u32 %s3, 4
      %s54 = int_to_ptr.hbm [resolvable:$true] %s53
      %s55 = sshll.u32 [#allocation8], 4
      %s56 = int_to_ptr.vmem [resolvable:$true] %s55
      %58 = dma.hbm_to_vmem [thread:$0]  %s54, 128, %s56, [#allocation9]
    $region17: #{tpu_custom_call.1} parent=1 // pred_fallthru
      _
    // Predicated region
    $region18: #{tpu_custom_call.1} parent=1 // pred_check
      _
    $region19: #{tpu_custom_call.1} parent=1 // pred_check_branch
      %60 = sbr.rel (0) target = $region21
    $region20: #{tpu_custom_call.1} parent=1 // pred_region
      %62 = dma.done [#allocation3], 128
    $region21: #{tpu_custom_call.1} parent=1 // pred_fallthru
      _
    // Predicated region
    $region22: #{tpu_custom_call.1} parent=1 // pred_check
      _
    $region23: #{tpu_custom_call.1} parent=1 // pred_check_branch
      %64 = sbr.rel (0) target = $region25
    $region24: #{tpu_custom_call.1} parent=1 // pred_region
      %66 = dma.done [#allocation6], 128
    $region25: #{tpu_custom_call.1} parent=1 // pred_fallthru
      _
    // Predicated region
    $region26: #{tpu_custom_call.1} parent=1 // pred_check
      _
    $region27: #{tpu_custom_call.1} parent=1 // pred_check_branch
      %68 = sbr.rel (0) target = $region29
    $region28: #{tpu_custom_call.1} parent=1 // pred_region
      %70 = dma.done [#allocation6], 1024
    $region29: #{tpu_custom_call.1} parent=1 // pred_fallthru
      _
    // Predicated region
    $region30: #{tpu_custom_call.1} parent=1 // pred_check
      _
    $region31: #{tpu_custom_call.1} parent=1 // pred_check_branch
      %72 = sbr.rel (0) target = $region33
    $region32: #{tpu_custom_call.1} parent=1 // pred_region
      %74 = dma.done [#allocation9], 128
    $region33: #{tpu_custom_call.1} parent=1 // pred_fallthru
      _
    %v75 = vld [vmem:[#allocation2] sm:$0xff]
    %v76 = vld [vmem:[#allocation5] sm:$0xff]
    %v77 = vld [vmem:[#allocation7] sm:$0xff]
    %v78 = vld [vmem:[#allocation7 + $0x8] sm:$0xff]
    %v79 = vld [vmem:[#allocation7 + $0x10] sm:$0xff]
    %v80 = vld [vmem:[#allocation7 + $0x18] sm:$0xff]
    %v81 = vld [vmem:[#allocation7 + $0x20] sm:$0xff]
    %v82 = vld [vmem:[#allocation7 + $0x28] sm:$0xff]
    %v83 = vld [vmem:[#allocation7 + $0x30] sm:$0xff]
    %v84 = vld [vmem:[#allocation7 + $0x38] sm:$0xff]
    %v85 = vld [vmem:[#allocation8] sm:$0xff]
    %v86 = vsub.f32 %v75, %v76
    %v87 = vmul.f32 %v86, %v86
    %88 = vadd.xlane.f32.xlu0 %v87
    %v89 = vpop.xlane.xlu0 %88
    %v91 = vrot.slane %v75, 1
    %v92 = vrot.slane %v75, 2
    %v93 = vrot.slane %v75, 3
    %v94 = vrot.slane %v75, 4
    %v95 = vrot.slane %v75, 5
    %v96 = vrot.slane %v75, 6
    %v97 = vrot.slane %v75, 7
    %v98 = vperm.slane %v75, 0
    %v99 = vperm.slane %v91, 0
    %v100 = vperm.slane %v92, 0
    %v101 = vperm.slane %v93, 0
    %v102 = vperm.slane %v94, 0
    %v103 = vperm.slane %v95, 0
    %v104 = vperm.slane %v96, 0
    %v105 = vperm.slane %v97, 0
    %v114 = vsub.f32 %v98, %v77
    %v115 = vsub.f32 %v99, %v78
    %v116 = vsub.f32 %v100, %v79
    %v117 = vsub.f32 %v101, %v80
    %v118 = vsub.f32 %v102, %v81
    %v119 = vsub.f32 %v103, %v82
    %v120 = vsub.f32 %v104, %v83
    %v121 = vsub.f32 %v105, %v84
    %v122 = vmul.f32 %v114, %v114
    %v123 = vmul.f32 %v115, %v115
    %v124 = vmul.f32 %v116, %v116
    %v125 = vmul.f32 %v117, %v117
    %v126 = vmul.f32 %v118, %v118
    %v127 = vmul.f32 %v119, %v119
    %v128 = vmul.f32 %v120, %v120
    %v129 = vmul.f32 %v121, %v121
    %130 = vadd.xlane.f32.xlu0 %v122
    %v131 = vpop.xlane.xlu0 %130
    %132 = vadd.xlane.f32.xlu0 %v123
    %v133 = vpop.xlane.xlu0 %132
    %134 = vadd.xlane.f32.xlu0 %v124
    %v135 = vpop.xlane.xlu0 %134
    %136 = vadd.xlane.f32.xlu0 %v125
    %v137 = vpop.xlane.xlu0 %136
    %138 = vadd.xlane.f32.xlu0 %v126
    %v139 = vpop.xlane.xlu0 %138
    %140 = vadd.xlane.f32.xlu0 %v127
    %v141 = vpop.xlane.xlu0 %140
    %142 = vadd.xlane.f32.xlu0 %v128
    %v143 = vpop.xlane.xlu0 %142
    %144 = vadd.xlane.f32.xlu0 %v129
    %v145 = vpop.xlane.xlu0 %144
    %v154 = vlaneseq
    %v155 = vand.u32 %v154, 127
    %v156 = vperm.slane %v131, %v155
    %v157 = vperm.slane %v133, %v155
    %v158 = vperm.slane %v135, %v155
    %v159 = vperm.slane %v137, %v155
    %v160 = vperm.slane %v139, %v155
    %v161 = vperm.slane %v141, %v155
    %v162 = vperm.slane %v143, %v155
    %v163 = vperm.slane %v145, %v155
    %vm164 = vcmask 1041409
    %v165 = vsel %vm164, %v157, %v156
    %vm166 = vcmask 1042434
    %v167 = vsel %vm166, %v158, %v165
    %vm168 = vcmask 1043459
    %v169 = vsel %vm168, %v159, %v167
    %vm170 = vcmask 1044484
    %v171 = vsel %vm170, %v160, %v169
    %vm172 = vcmask 1045509
    %v173 = vsel %vm172, %v161, %v171
    %vm174 = vcmask 1046534
    %v175 = vsel %vm174, %v162, %v173
    %vm176 = vcmask 1047559
    %v177 = vsel %vm176, %v163, %v175
    %v179 = vsub.f32 %v89, %v177
    %v180 = vadd.f32 %v179, %v85
    %v181 = vmax.f32 %v180, 0.0
    %vm182 = vcmask 64512
    %v183 = vsel %vm182, %v181, 0.0
    %184 = vadd.xlane.f32.xlu0 %v183
    %v185 = vpop.xlane.xlu0 %184
    %v186 = vrot.slane %v185, 4
    %v187 = vadd.f32 %v185, %v186
    %v188 = vrot.slane %v187, 2
    %v189 = vadd.f32 %v187, %v188
    %v190 = vrot.slane %v189, 1
    %v191 = vadd.f32 %v189, %v190
    %s192 = vtos %v191
    %v193 = vstv %s192
    %194 = vst [vmem:[#allocation10] sm:$0xff] %v193
    // Predicated region
    $region34: #{tpu_custom_call.1} parent=1 // pred_check
      _
    $region35: #{tpu_custom_call.1} parent=1 // pred_check_branch
      %196 = sbr.rel (0) target = $region37
    $region36: #{tpu_custom_call.1} parent=1 // pred_region
      %198 = vsyncadd [#allocation4], 0
      %s200 = sshll.u32 [#allocation10], 4
      %s201 = int_to_ptr.vmem [resolvable:$true] %s200
      %s202 = sshll.u32 %s4, 4
      %s203 = int_to_ptr.hbm [resolvable:$true] %s202
      %205 = dma.vmem_to_hbm [thread:$0]  %s201, 128, %s203, [#allocation4]
    $region37: #{tpu_custom_call.1} parent=1 // pred_fallthru
      _
    // Predicated region
    $region38: #{tpu_custom_call.1} parent=1 // pred_check
      _
    $region39: #{tpu_custom_call.1} parent=1 // pred_check_branch
      %207 = sbr.rel (0) target = $region41
    $region40: #{tpu_custom_call.1} parent=1 // pred_region
      %209 = dma.done [#allocation4], 128
    $region41: #{tpu_custom_call.1} parent=1 // pred_fallthru
      _
    %210 = vsyncpa [#allocation3], 1
    %211 = vsyncpa [#allocation6], 1
    %212 = vsyncpa [#allocation9], 1
    %213 = vsyncpa [#allocation4], 1

</llo_original>
